<compile_context>
chip_gen: v5e
topology: v5e:2x2
jax: 0.10.0
libtpu: 0.0.40
codegen_flags: <defaults>
</compile_context>

<pallas_src>
import functools
import numpy as np
import jax
import jax.numpy as jnp
from jax import lax
from jax.experimental import pallas as pl
from jax.experimental.pallas import tpu as pltpu

TILE_R = 128          # rows per strip  ("neg" = label==1 samples)
TILE_C_MAX = 32768    # lanes per column tile ("pos" = label==0 samples)
LANE = 128
_BIG = 1e30           # finite sentinel for "not this class / padding"


def _round_up(x, m):
    return ((x + m - 1) // m) * m


def _auc_hinge_kernel(pos_ref, neg_ref, out_ref, acc_ref, neg_bc_ref, *, p, chunks):
    c = pl.program_id(1)
    last_c = pl.num_programs(1) - 1

    @pl.when(c == 0)
    def _init():
        acc_ref[...] = jnp.zeros_like(acc_ref)
        # One XLU transpose + one lane broadcast per ROW STRIP (not per step).
        neg_col = jnp.transpose(neg_ref[...], (1, 0))               # (TILE_R, 1)
        neg_bc_ref[...] = jnp.broadcast_to(neg_col, (TILE_R, LANE))

    neg_bc = neg_bc_ref[...]   # loop-invariant: lives in vregs across the chunk loop

    def body(k, part):
        off = pl.multiple_of(k * LANE, LANE)
        pos_chunk = pos_ref[:, pl.ds(off, LANE)]                    # (1, 128)
        d = pos_chunk - neg_bc                                      # (TILE_R, 128)
        m = jnp.minimum(d, 0.0)
        if p == 2:
            return part + m * m                                     # fast path
        return part + (-m) ** p                                     # static int p

    part = lax.fori_loop(0, chunks, body,
                         jnp.zeros((TILE_R, LANE), jnp.float32),
                         unroll=min(4, chunks))
    # Single narrow accumulator RMW per grid step.
    acc_ref[...] += part

    @pl.when(c == last_c)
    def _finalize():
        # One sublane reduce per row strip; lane reduce happens in XLA.
        out_ref[...] = jnp.sum(acc_ref[...], axis=0, keepdims=True)[None]  # (1,1,128)


def auc_loss(y_pred, y_true, *, gamma=0.15, alpha=0.6, p=2):
    yp = jnp.ravel(y_pred).astype(jnp.float32)
    yt = jnp.ravel(y_true).astype(jnp.float32)
    n = yp.shape[0]

    # ---- O(N) / O(N log N) work in plain XLA (hoisted out of the kernel) ----
    bce = jnp.mean(jnp.maximum(yp, 0.0) - yp * yt + jnp.log1p(jnp.exp(-jnp.abs(yp))))
    pred = jax.nn.sigmoid(yp)
    is_pos = (yt == 0.0)                 # "pos" = label 0
    is_neg = (yt == 1.0)                 # "neg" = label 1

    pos_val = jnp.where(is_pos, pred, _BIG)
    neg_val = jnp.where(is_neg, pred + gamma, -_BIG)   # gamma pre-folded

    # Pair count (denominator of the mean) via sort + searchsorted:
    #   count of (i, j) with sigmoid(x_j) < sigmoid(x_i) + gamma (strict <,
    #   identical to the kernel's d < 0 since d = pos - (neg + gamma)).
    pos_sorted = jnp.sort(jnp.where(is_pos, pred, jnp.inf))
    thresh = jnp.where(is_neg, pred + gamma, -jnp.inf)
    pair_cnt = jnp.sum(
        jnp.searchsorted(pos_sorted, thresh, side="left").astype(jnp.float32))

    # ---- tiling: column tile <= TILE_C_MAX, multiple of 128, low waste ----
    n128 = _round_up(max(n, 1), 128)
    lanes = n128 // 128
    num_c = -(-n128 // TILE_C_MAX)                 # cdiv
    tile_c = 128 * (-(-lanes // num_c))            # multiple of 128, <= TILE_C_MAX
    np_pad = tile_c * num_c                        # multiple of tile_c and TILE_R
    num_r = np_pad // TILE_R
    pad = np_pad - n
    chunks = tile_c // LANE

    pos_row = jnp.pad(pos_val, (0, pad), constant_values=_BIG).reshape(1, np_pad)
    neg_row = jnp.pad(neg_val, (0, pad), constant_values=-_BIG).reshape(1, np_pad)

    kernel = functools.partial(_auc_hinge_kernel, p=p, chunks=chunks)
    sums = pl.pallas_call(
        kernel,
        out_shape=jax.ShapeDtypeStruct((num_r, 1, 128), jnp.float32),
        grid_spec=pltpu.PrefetchScalarGridSpec(
            num_scalar_prefetch=0,
            grid=(num_r, num_c),
            in_specs=[
                pl.BlockSpec((1, tile_c), lambda r, c: (0, c)),   # pos (lane-dense)
                pl.BlockSpec((1, TILE_R), lambda r, c: (0, r)),   # neg (row strip)
            ],
            out_specs=pl.BlockSpec((1, 1, 128), lambda r, c: (r, 0, 0)),
            scratch_shapes=[
                pltpu.VMEM((TILE_R, LANE), jnp.float32),  # narrow accumulator (64 KiB)
                pltpu.VMEM((TILE_R, LANE), jnp.float32),  # cached neg broadcast
            ],
        ),
        compiler_params=pltpu.CompilerParams(
            dimension_semantics=("parallel", "arbitrary")),
    )(pos_row, neg_row)

    auc_sum = jnp.sum(sums)                     # lane + strip reduce in XLA
    auc = auc_sum / jnp.maximum(pair_cnt, 1.0)
    return jnp.where(pair_cnt > 0.0, alpha * bce + (1.0 - alpha) * auc, bce)


def _reference(yp, yt, gamma=0.15, alpha=0.6, p=2):
    yp = np.asarray(yp, np.float64).ravel()
    yt = np.asarray(yt, np.float64).ravel()
    pred = 1.0 / (1.0 + np.exp(-yp))
    pos = pred[yt == 0][None, :]
    neg = pred[yt == 1][:, None]
    diff = (np.zeros_like(pos * neg) + pos) - neg - gamma
    masked = diff[diff < 0.0]
    bce = np.mean(np.maximum(yp, 0.0) - yp * yt + np.log1p(np.exp(-np.abs(yp))))
    if masked.shape[0] == 0:
        return bce
    auc = np.mean((-masked) ** p)
    return alpha * bce + (1.0 - alpha) * auc


if __name__ == "__main__":
    key = jax.random.PRNGKey(0)
    k1, k2 = jax.random.split(key)
    n = 200
    y_pred = jax.random.normal(k1, (n,), dtype=jnp.float32) * 2.0
    y_true = (jax.random.uniform(k2, (n,)) > 0.5).astype(jnp.float32)

    loss = jax.block_until_ready(auc_loss(y_pred, y_true))
    ref = _reference(np.array(y_pred), np.array(y_true))
    assert abs(float(loss) - float(ref)) < 1e-3 * max(1.0, abs(float(ref))), \
        (float(loss), float(ref))
    print("KERNEL_OK")
</pallas_src>

<mosaic_0001>
module attributes {stable_mosaic.version = 11 : i64} {
  func.func @_auc_hinge_kernel(%arg0: i32, %arg1: i32, %arg2: memref<1x256xf32, #tpu.memory_space<vmem>>, %arg3: memref<1x128xf32, #tpu.memory_space<vmem>>, %arg4: memref<1x1x128xf32, #tpu.memory_space<vmem>>, %arg5: memref<128x128xf32, #tpu.memory_space<vmem>>, %arg6: memref<128x128xf32, #tpu.memory_space<vmem>>) attributes {dimension_semantics = [#tpu.dimension_semantics<parallel>, #tpu.dimension_semantics<arbitrary>], iteration_bounds = array<i64: 2, 1>, scalar_prefetch = 0 : i64, scratch_operands = 2 : i64, tpu.core_type = #tpu.core_type<tc>, window_params = [{transform_indices = @transform_0, window_bounds = array<i64: 1, 256>}, {transform_indices = @transform_1, window_bounds = array<i64: 1, 128>}, {transform_indices = @transform_2, window_bounds = array<i64: 1, 1, 128>}]} {
    %c0_i32 = arith.constant 0 : i32
    %0 = arith.cmpi eq, %arg1, %c0_i32 : i32
    %1 = arith.extui %0 : i1 to i32
    %c0_i32_0 = arith.constant 0 : i32
    %2 = arith.cmpi ne, %1, %c0_i32_0 : i32
    scf.if %2 {
      %cst_14 = arith.constant 0.000000e+00 : f32
      %31 = vector.broadcast %cst_14 : f32 to vector<128x128xf32>
      %c0_15 = arith.constant 0 : index
      %c0_16 = arith.constant 0 : index
      %32 = vector.load %arg5[%c0_15, %c0_16] : memref<128x128xf32, #tpu.memory_space<vmem>>, vector<128x128xf32>
      tpu.vector_store %arg5[%c0_15, %c0_16], %31 {strides = array<i32>} : memref<128x128xf32, #tpu.memory_space<vmem>>, vector<128x128xf32>,
      %c0_17 = arith.constant 0 : index
      %c0_18 = arith.constant 0 : index
      %33 = vector.load %arg3[%c0_17, %c0_18] : memref<1x128xf32, #tpu.memory_space<vmem>>, vector<1x128xf32>
      %34 = tpu.transpose %33, [1, 0] : vector<1x128xf32> -> vector<128x1xf32>
      %35 = vector.shape_cast %34 : vector<128x1xf32> to vector<128x1xf32>
      %36 = vector.broadcast %35 : vector<128x1xf32> to vector<128x128xf32>
      %c0_19 = arith.constant 0 : index
      %c0_20 = arith.constant 0 : index
      %37 = vector.load %arg6[%c0_19, %c0_20] : memref<128x128xf32, #tpu.memory_space<vmem>>, vector<128x128xf32>
      tpu.vector_store %arg6[%c0_19, %c0_20], %36 {strides = array<i32>} : memref<128x128xf32, #tpu.memory_space<vmem>>, vector<128x128xf32>,
    } else {
    }
    %c0 = arith.constant 0 : index
    %c0_1 = arith.constant 0 : index
    %3 = vector.load %arg6[%c0, %c0_1] : memref<128x128xf32, #tpu.memory_space<vmem>>, vector<128x128xf32>
    %cst = arith.constant 0.000000e+00 : f32
    %4 = vector.broadcast %cst : f32 to vector<128x128xf32>
    %c0_i32_2 = arith.constant 0 : i32
    %c128_i32 = arith.constant 128 : i32
    %5 = arith.muli %c0_i32_2, %c128_i32 : i32
    %6 = tpu.assume_multiple %5, 128 : i32
    %c0_3 = arith.constant 0 : index
    %7 = arith.index_cast %6 : i32 to index
    %8 = vector.load %arg2[%c0_3, %7] : memref<1x256xf32, #tpu.memory_space<vmem>>, vector<1x128xf32>
    %9 = vector.broadcast %8 : vector<1x128xf32> to vector<128x128xf32>
    %10 = arith.subf %9, %3 : vector<128x128xf32>
    %cst_4 = arith.constant 0.000000e+00 : f32
    %11 = vector.broadcast %cst_4 : f32 to vector<128x128xf32>
    %12 = arith.minimumf %10, %11 : vector<128x128xf32>
    %13 = arith.mulf %12, %12 : vector<128x128xf32>
    %14 = arith.addf %4, %13 : vector<128x128xf32>
    %c1_i32 = arith.constant 1 : i32
    %c128_i32_5 = arith.constant 128 : i32
    %15 = arith.muli %c1_i32, %c128_i32_5 : i32
    %16 = tpu.assume_multiple %15, 128 : i32
    %c0_6 = arith.constant 0 : index
    %17 = arith.index_cast %16 : i32 to index
    %18 = vector.load %arg2[%c0_6, %17] : memref<1x256xf32, #tpu.memory_space<vmem>>, vector<1x128xf32>
    %19 = vector.broadcast %18 : vector<1x128xf32> to vector<128x128xf32>
    %20 = arith.subf %19, %3 : vector<128x128xf32>
    %cst_7 = arith.constant 0.000000e+00 : f32
    %21 = vector.broadcast %cst_7 : f32 to vector<128x128xf32>
    %22 = arith.minimumf %20, %21 : vector<128x128xf32>
    %23 = arith.mulf %22, %22 : vector<128x128xf32>
    %24 = arith.addf %14, %23 : vector<128x128xf32>
    %c2_i32 = arith.constant 2 : i32
    %c0_8 = arith.constant 0 : index
    %c0_9 = arith.constant 0 : index
    %25 = vector.load %arg5[%c0_8, %c0_9] : memref<128x128xf32, #tpu.memory_space<vmem>>, vector<128x128xf32>
    %26 = arith.addf %25, %24 : vector<128x128xf32>
    %c0_10 = arith.constant 0 : index
    %c0_11 = arith.constant 0 : index
    %27 = vector.load %arg5[%c0_10, %c0_11] : memref<128x128xf32, #tpu.memory_space<vmem>>, vector<128x128xf32>
    tpu.vector_store %arg5[%c0_10, %c0_11], %26 {strides = array<i32>} : memref<128x128xf32, #tpu.memory_space<vmem>>, vector<128x128xf32>,
    %c0_i32_12 = arith.constant 0 : i32
    %28 = arith.cmpi eq, %arg1, %c0_i32_12 : i32
    %29 = arith.extui %28 : i1 to i32
    %c0_i32_13 = arith.constant 0 : i32
    %30 = arith.cmpi ne, %29, %c0_i32_13 : i32
    scf.if %30 {
      %c0_14 = arith.constant 0 : index
      %c0_15 = arith.constant 0 : index
      %31 = vector.load %arg5[%c0_14, %c0_15] : memref<128x128xf32, #tpu.memory_space<vmem>>, vector<128x128xf32>
      %cst_16 = arith.constant dense<0.000000e+00> : vector<128xf32>
      %32 = vector.multi_reduction <add>, %31, %cst_16 [0] : vector<128x128xf32> to vector<128xf32>
      %33 = vector.shape_cast %32 : vector<128xf32> to vector<1x128xf32>
      %34 = vector.shape_cast %33 : vector<1x128xf32> to vector<1x1x128xf32>
      %c0_17 = arith.constant 0 : index
      %c0_18 = arith.constant 0 : index
      %c0_19 = arith.constant 0 : index
      %35 = vector.load %arg4[%c0_17, %c0_18, %c0_19] : memref<1x1x128xf32, #tpu.memory_space<vmem>>, vector<1x1x128xf32>
      tpu.vector_store %arg4[%c0_17, %c0_18, %c0_19], %34 {strides = array<i32>} : memref<1x1x128xf32, #tpu.memory_space<vmem>>, vector<1x1x128xf32>,
    } else {
    }
    return
  }
  func.func @transform_0(%arg0: i32, %arg1: i32) -> (i32, i32) {
    %c0_i32 = arith.constant 0 : i32
    %c0_i32_0 = arith.constant 0 : i32
    return %c0_i32, %arg1 : i32, i32
  }
  func.func @transform_1(%arg0: i32, %arg1: i32) -> (i32, i32) {
    %c0_i32 = arith.constant 0 : i32
    %c0_i32_0 = arith.constant 0 : i32
    return %c0_i32, %arg0 : i32, i32
  }
  func.func @transform_2(%arg0: i32, %arg1: i32) -> (i32, i32, i32) {
    %c0_i32 = arith.constant 0 : i32
    %c0_i32_0 = arith.constant 0 : i32
    %c0_i32_1 = arith.constant 0 : i32
    return %arg0, %c0_i32, %c0_i32_0 : i32, i32, i32
  }
}

</mosaic_0001>

<llo_original>
// kernel: tpu_custom_call.1
$region0: #{tpu_custom_call.1}
  #allocation0 [shape = 'u32[]', space=smem, size = 0x4, offset = 0x4, fixed_abs, tag = 'smem constant byte address 0x4 - core index']
  #allocation1 [shape = 'u32[72,128]{1,0:T(1,128)}', space=vmem, size = 0x9000, scoped, tag = 'internal scratch']
  #allocation2 [shape = 'f32[128,128]{1,0:T(8,128)}', space=vmem, size = 0x10000, scoped, tag = 'scratch operand']
  #allocation3 [shape = 'f32[128,128]{1,0:T(8,128)}', space=vmem, size = 0x10000, scoped, tag = 'scratch operand']
  %s0 = inlined_call_operand.hbm [shape: f32[1,256], index: 0, kind: input, shape index: {}]
  %s1 = inlined_call_operand.hbm [shape: f32[1,256], index: 1, kind: input, shape index: {}]
  %s2 = inlined_call_operand.hbm [shape: f32[2,1,128], index: 2, kind: output, shape index: {}]
  %s3 = sld [smem:[#allocation0]]
  $region57: #{tpu_custom_call.1} parent=0
    _
  %s5 = ssub.s32 1, %s3
  %s6 = scalar_select 0, %s5, %s3
  $region1: #{tpu_custom_call.1} parent=0
    #allocation4 [shape = 'u8[1024]{0}', space=vmem, size = 0x400, scoped, tag = 'input window, operand 0, single buffered']
    #allocation5 [shape = 's32[2]{0}', space=sflag, size = 0x8, scoped, tag = 'scoped memory for tpu_custom_call.1']
    #allocation6 [shape = 's32[2]{0}', space=sflag, size = 0x8, scoped, tag = 'scoped memory for tpu_custom_call.1']
    #allocation7 [shape = 'u8[1024]{0}', space=vmem, size = 0x400, scoped, tag = 'input window, operand 1']
    #allocation8 [shape = 's32[2]{0}', space=sflag, size = 0x8, scoped, tag = 'scoped memory for tpu_custom_call.1']
    #allocation9 [shape = 'u8[1024]{0}', space=vmem, size = 0x400, scoped, tag = 'output window, operand 0']
    %7 = vsyncpa [#allocation5], 0
    %8 = vsyncpa [#allocation8], 0
    %s9 = scalar_lea.sflag [#allocation8], 1
    %10 = vsyncpa %s9, 0
    %11 = vsyncpa [#allocation6], 0
    %s12 = scalar_lea.sflag [#allocation6], 1
    %13 = vsyncpa %s12, 0
    loop: start=0, step=1, limit=4
    $region2: #{tpu_custom_call.1} parent=1 // loop_pre_header
      _
    $region3: #{tpu_custom_call.1} parent=1 // loop_header
      %s15 = sphi 0, %s19
      %p16 = scmp.ge.s32.totalorder %s15, 4
      %s22 = sphi 0, %s34
      %s23 = sphi 0, %s30
      %s24 = sphi 0, %s22
      %s25 = sphi 0, %s23
      %s26 = sphi 0, %s24
      %s27 = sphi 0, %s25
      %s37 = sphi 0, %s39
      %s40 = sphi 0, %s37
      %s41 = sphi 0, %s40
      %s57 = sphi 0, %s41
      %s63 = sphi 0, %s65
      %s66 = sphi 0, %s63
      %s67 = sphi 0, %s66
      %s83 = sphi 0, %s67
      %s89 = sphi 0, %s91
      %s92 = sphi 0, %s89
      %s93 = sphi 0, %s92
      %s109 = sphi 0, %s93
    $region4: #{tpu_custom_call.1} parent=1 // loop_header_branch
      %18 = sbr.rel (%p16) target = $region8
    $region5: #{tpu_custom_call.1} parent=1 // loop_body
      %s20 = ssub.s32 %s15, 1
      %s21 = ssub.s32 %s15, 2
      %s28 = sadd.s32 1, %s23
      %p29 = scmp.ge.s32.totalorder %s28, 1
      %s30 = scalar_select %p29, 0, %s28
      %s31 = sadd.s32 1, %s22
      %s32 = scalar_select %p29, %s31, %s22
      %p33 = scmp.ge.s32.totalorder %s32, 2
      %s34 = scalar_select %p33, 0, %s32
      %s35 = ssub.s32 %s23, %s30
      %p36 = scmp.eq.s32.totalorder %s35, 0
      %s38 = sadd.s32 %s37, 1
      %s39 = scalar_select %p36, %s37, %s38
      %p42 = pneg %p36
      %p43 = scmp.eq.s32.totalorder %s15, 1
      %p44 = por %p42, %p43
      %p45 = scmp.ne.s32.totalorder %s37, %s40
      %p46 = scmp.eq.s32.totalorder %s15, 0
      %p47 = por %p45, %p46
      %p48 = scmp.ne.s32.totalorder %s37, %s40
      %p49 = scmp.eq.s32.totalorder %s20, 1
      %p50 = por %p48, %p49
      %p51 = scmp.ne.s32.totalorder %s40, %s41
      %p52 = scmp.eq.s32.totalorder %s20, 0
      %p53 = por %p51, %p52
      %p54 = scmp.ne.s32.totalorder %s40, %s41
      %p55 = scmp.eq.s32.totalorder %s21, 1
      %p56 = por %p54, %p55
      %p58 = scmp.ne.s32.totalorder %s41, %s57
      %p59 = scmp.eq.s32.totalorder %s21, 0
      %p60 = por %p58, %p59
      %s61 = ssub.s32 %s22, %s34
      %p62 = scmp.eq.s32.totalorder %s61, 0
      %s64 = sadd.s32 %s63, 1
      %s65 = scalar_select %p62, %s63, %s64
      %p68 = pneg %p62
      %p69 = scmp.eq.s32.totalorder %s15, 1
      %p70 = por %p68, %p69
      %p71 = scmp.ne.s32.totalorder %s63, %s66
      %p72 = scmp.eq.s32.totalorder %s15, 0
      %p73 = por %p71, %p72
      %p74 = scmp.ne.s32.totalorder %s63, %s66
      %p75 = scmp.eq.s32.totalorder %s20, 1
      %p76 = por %p74, %p75
      %p77 = scmp.ne.s32.totalorder %s66, %s67
      %p78 = scmp.eq.s32.totalorder %s20, 0
      %p79 = por %p77, %p78
      %p80 = scmp.ne.s32.totalorder %s66, %s67
      %p81 = scmp.eq.s32.totalorder %s21, 1
      %p82 = por %p80, %p81
      %p84 = scmp.ne.s32.totalorder %s67, %s83
      %p85 = scmp.eq.s32.totalorder %s21, 0
      %p86 = por %p84, %p85
      %s87 = ssub.s32 %s22, %s34
      %p88 = scmp.eq.s32.totalorder %s87, 0
      %s90 = sadd.s32 %s89, 1
      %s91 = scalar_select %p88, %s89, %s90
      %p94 = pneg %p88
      %p95 = scmp.eq.s32.totalorder %s15, 1
      %p96 = por %p94, %p95
      %p97 = scmp.ne.s32.totalorder %s89, %s92
      %p98 = scmp.eq.s32.totalorder %s15, 0
      %p99 = por %p97, %p98
      %p100 = scmp.ne.s32.totalorder %s89, %s92
      %p101 = scmp.eq.s32.totalorder %s20, 1
      %p102 = por %p100, %p101
      %p103 = scmp.ne.s32.totalorder %s92, %s93
      %p104 = scmp.eq.s32.totalorder %s20, 0
      %p105 = por %p103, %p104
      %p106 = scmp.ne.s32.totalorder %s92, %s93
      %p107 = scmp.eq.s32.totalorder %s21, 1
      %p108 = por %p106, %p107
      %p110 = scmp.ne.s32.totalorder %s93, %s109
      %p111 = scmp.eq.s32.totalorder %s21, 0
      %p112 = por %p110, %p111
      %p113 = scmp.le.s32.totalorder 1, %s15
      %p114 = scmp.lt.s32.totalorder %s15, 3
      %p115 = pnand %p113, %p114
      %p116 = pneg %p115
      // Predicated region
      $region9: #{tpu_custom_call.1} parent=5 // pred_check
        _
      $region10: #{tpu_custom_call.1} parent=5 // pred_check_branch
        %118 = sbr.rel (%p115) target = $region12
      $region11: #{tpu_custom_call.1} parent=5 // pred_region
        %s119 = ssub.s32 %s15, 1
        // Predicated region
        $region13: #{tpu_custom_call.1} parent=11 // pred_check
          %p120 = pneg %p53
        $region14: #{tpu_custom_call.1} parent=11 // pred_check_branch
          %122 = sbr.rel (%p120) target = $region16
        $region15: #{tpu_custom_call.1} parent=11 // pred_region
          %s123 = smul.u32 2, %s25
          %125 = vsyncadd [#allocation5], 0
          %s126 = scalar_lea.hbm %s0, %s123
          %s128 = sshll.u32 %s126, 4
          %s129 = int_to_ptr.hbm [resolvable:$true] %s128
          %s130 = sshll.u32 [#allocation4], 4
          %s131 = int_to_ptr.vmem [resolvable:$true] %s130
          %133 = dma.hbm_to_vmem [thread:$0]  %s129, 32, %s131, [#allocation5]
        $region16: #{tpu_custom_call.1} parent=11 // pred_fallthru
          _
      $region12: #{tpu_custom_call.1} parent=5 // pred_fallthru
        _
      %p134 = scmp.lt.s32.totalorder %s15, 2
      // Predicated region
      $region17: #{tpu_custom_call.1} parent=5 // pred_check
        %p135 = pneg %p134
      $region18: #{tpu_custom_call.1} parent=5 // pred_check_branch
        %137 = sbr.rel (%p135) target = $region20
      $region19: #{tpu_custom_call.1} parent=5 // pred_region
        // Predicated region
        $region21: #{tpu_custom_call.1} parent=19 // pred_check
          %p138 = pneg %p73
        $region22: #{tpu_custom_call.1} parent=19 // pred_check_branch
          %140 = sbr.rel (%p138) target = $region24
        $region23: #{tpu_custom_call.1} parent=19 // pred_region
          %s141 = sand.u32 %s63, 1
          %s142 = scalar_lea.sflag [#allocation8], %s141
          %s143 = sand.u32 %s63, 1
          %s144 = scalar_lea.vmem [#allocation7], %s143
          %146 = vsyncadd %s142, 0
          %s147 = scalar_lea.hbm %s1, %s22
          %s149 = sshll.u32 %s147, 4
          %s150 = int_to_ptr.hbm [resolvable:$true] %s149
          %s151 = sshll.u32 %s144, 4
          %s152 = int_to_ptr.vmem [resolvable:$true] %s151
          %154 = dma.hbm_to_vmem [thread:$0]  %s150, 16, %s152, %s142
        $region24: #{tpu_custom_call.1} parent=19 // pred_fallthru
          _
      $region20: #{tpu_custom_call.1} parent=5 // pred_fallthru
        _
      %p155 = scmp.le.s32.totalorder 1, %s15
      %p156 = scmp.lt.s32.totalorder %s15, 3
      %p157 = pnand %p155, %p156
      %p158 = pneg %p157
      // Predicated region
      $region25: #{tpu_custom_call.1} parent=5 // pred_check
        _
      $region26: #{tpu_custom_call.1} parent=5 // pred_check_branch
        %160 = sbr.rel (%p157) target = $region28
      $region27: #{tpu_custom_call.1} parent=5 // pred_region
        %s161 = ssub.s32 %s15, 1
        // Predicated region
        $region29: #{tpu_custom_call.1} parent=27 // pred_check
          %p162 = pneg %p53
        $region30: #{tpu_custom_call.1} parent=27 // pred_check_branch
          %164 = sbr.rel (%p162) target = $region32
        $region31: #{tpu_custom_call.1} parent=27 // pred_region
          %166 = dma.done [#allocation5], 32
        $region32: #{tpu_custom_call.1} parent=27 // pred_fallthru
          _
        %s167 = sand.u32 %s66, 1
        %s168 = scalar_lea.sflag [#allocation8], %s167
        %s169 = sand.u32 %s66, 1
        %s170 = scalar_lea.vmem [#allocation7], %s169
        // Predicated region
        $region33: #{tpu_custom_call.1} parent=27 // pred_check
          %p171 = pneg %p79
        $region34: #{tpu_custom_call.1} parent=27 // pred_check_branch
          %173 = sbr.rel (%p171) target = $region36
        $region35: #{tpu_custom_call.1} parent=27 // pred_region
          %175 = dma.done %s168, 16
        $region36: #{tpu_custom_call.1} parent=27 // pred_fallthru
          _
        %p176 = pneg %p53
        %p177 = pneg %p50
        %s178 = sand.u32 %s66, 1
        %s179 = scalar_lea.sflag [#allocation8], %s178
        %s180 = sand.u32 %s66, 1
        %s181 = scalar_lea.vmem [#allocation7], %s180
        %p182 = pneg %p79
        %p183 = pneg %p76
        %p184 = pneg %p105
        %p185 = pneg %p102
        %s186 = sand.u32 %s92, 1
        %s187 = scalar_lea.sflag [#allocation6], %s186
        %s188 = sand.u32 %s92, 1
        %s189 = scalar_lea.vmem [#allocation9], %s188
        %s190 = smul.u32 2, %s25
        %p191 = scmp.eq.s32.totalorder %s25, 0
        // Predicated region
        $region37: #{tpu_custom_call.1} parent=27 // pred_check
          %p192 = pneg %p191
        $region38: #{tpu_custom_call.1} parent=27 // pred_check_branch
          %194 = sbr.rel (%p192) target = $region40
        $region39: #{tpu_custom_call.1} parent=27 // pred_region
          %195 = vst [vmem:[#allocation2] sm:$0xff] 0.0
          %196 = vst [vmem:[#allocation2 + $0x8] sm:$0xff] 0.0
          %197 = vst [vmem:[#allocation2 + $0x10] sm:$0xff] 0.0
          %198 = vst [vmem:[#allocation2 + $0x18] sm:$0xff] 0.0
          %199 = vst [vmem:[#allocation2 + $0x20] sm:$0xff] 0.0
          %200 = vst [vmem:[#allocation2 + $0x28] sm:$0xff] 0.0
          %201 = vst [vmem:[#allocation2 + $0x30] sm:$0xff] 0.0
          %202 = vst [vmem:[#allocation2 + $0x38] sm:$0xff] 0.0
          %203 = vst [vmem:[#allocation2 + $0x40] sm:$0xff] 0.0
          %204 = vst [vmem:[#allocation2 + $0x48] sm:$0xff] 0.0
          %205 = vst [vmem:[#allocation2 + $0x50] sm:$0xff] 0.0
          %206 = vst [vmem:[#allocation2 + $0x58] sm:$0xff] 0.0
          %207 = vst [vmem:[#allocation2 + $0x60] sm:$0xff] 0.0
          %208 = vst [vmem:[#allocation2 + $0x68] sm:$0xff] 0.0
          %209 = vst [vmem:[#allocation2 + $0x70] sm:$0xff] 0.0
          %210 = vst [vmem:[#allocation2 + $0x78] sm:$0xff] 0.0
          %v211 = vld [vmem:[%s170] sm:$0x1]
          %212 = vxpose.xlu0.b32.start [1/16] %v211, 128
          %213 = vxpose.xlu0.b32.cont [2/16] 0.0, 128
          %214 = vxpose.xlu0.b32.cont [3/16] 0.0, 128
          %215 = vxpose.xlu0.b32.cont [4/16] 0.0, 128
          %216 = vxpose.xlu0.b32.cont [5/16] 0.0, 128
          %217 = vxpose.xlu0.b32.cont [6/16] 0.0, 128
          %218 = vxpose.xlu0.b32.cont [7/16] 0.0, 128
          %219 = vxpose.xlu0.b32.cont [8/16] 0.0, 128
          %220 = vxpose.xlu0.b32.cont [9/16] 0.0, 128
          %221 = vxpose.xlu0.b32.cont [10/16] 0.0, 128
          %222 = vxpose.xlu0.b32.cont [11/16] 0.0, 128
          %223 = vxpose.xlu0.b32.cont [12/16] 0.0, 128
          %224 = vxpose.xlu0.b32.cont [13/16] 0.0, 128
          %225 = vxpose.xlu0.b32.cont [14/16] 0.0, 128
          %226 = vxpose.xlu0.b32.cont [15/16] 0.0, 128
          %227 = vxpose.xlu0.b32.end [16/16] 0.0, 128
          %v228 = vpop.trf.xlu0
          %v229 = vpop.trf.xlu0
          %v230 = vpop.trf.xlu0
          %v231 = vpop.trf.xlu0
          %v232 = vpop.trf.xlu0
          %v233 = vpop.trf.xlu0
          %v234 = vpop.trf.xlu0
          %v235 = vpop.trf.xlu0
          %v236 = vpop.trf.xlu0
          %v237 = vpop.trf.xlu0
          %v238 = vpop.trf.xlu0
          %v239 = vpop.trf.xlu0
          %v240 = vpop.trf.xlu0
          %v241 = vpop.trf.xlu0
          %v242 = vpop.trf.xlu0
          %v243 = vpop.trf.xlu0
          %245 = vset.pattern.permute.xlu0 0
          %246 = vperm.xlu0 %245, %v228
          %v247 = vpop.permute.xlu0 %246
          %250 = vset.pattern.permute.xlu0 0
          %251 = vperm.xlu0 %250, %v229
          %v252 = vpop.permute.xlu0 %251
          %255 = vset.pattern.permute.xlu0 0
          %256 = vperm.xlu0 %255, %v230
          %v257 = vpop.permute.xlu0 %256
          %260 = vset.pattern.permute.xlu0 0
          %261 = vperm.xlu0 %260, %v231
          %v262 = vpop.permute.xlu0 %261
          %265 = vset.pattern.permute.xlu0 0
          %266 = vperm.xlu0 %265, %v232
          %v267 = vpop.permute.xlu0 %266
          %270 = vset.pattern.permute.xlu0 0
          %271 = vperm.xlu0 %270, %v233
          %v272 = vpop.permute.xlu0 %271
          %275 = vset.pattern.permute.xlu0 0
          %276 = vperm.xlu0 %275, %v234
          %v277 = vpop.permute.xlu0 %276
          %280 = vset.pattern.permute.xlu0 0
          %281 = vperm.xlu0 %280, %v235
          %v282 = vpop.permute.xlu0 %281
          %285 = vset.pattern.permute.xlu0 0
          %286 = vperm.xlu0 %285, %v236
          %v287 = vpop.permute.xlu0 %286
          %290 = vset.pattern.permute.xlu0 0
          %291 = vperm.xlu0 %290, %v237
          %v292 = vpop.permute.xlu0 %291
          %295 = vset.pattern.permute.xlu0 0
          %296 = vperm.xlu0 %295, %v238
          %v297 = vpop.permute.xlu0 %296
          %300 = vset.pattern.permute.xlu0 0
          %301 = vperm.xlu0 %300, %v239
          %v302 = vpop.permute.xlu0 %301
          %305 = vset.pattern.permute.xlu0 0
          %306 = vperm.xlu0 %305, %v240
          %v307 = vpop.permute.xlu0 %306
          %310 = vset.pattern.permute.xlu0 0
          %311 = vperm.xlu0 %310, %v241
          %v312 = vpop.permute.xlu0 %311
          %315 = vset.pattern.permute.xlu0 0
          %316 = vperm.xlu0 %315, %v242
          %v317 = vpop.permute.xlu0 %316
          %320 = vset.pattern.permute.xlu0 0
          %321 = vperm.xlu0 %320, %v243
          %v322 = vpop.permute.xlu0 %321
          %324 = vst [vmem:[#allocation3] sm:$0xff] %v247
          %325 = vst [vmem:[#allocation3 + $0x8] sm:$0xff] %v252
          %326 = vst [vmem:[#allocation3 + $0x10] sm:$0xff] %v257
          %327 = vst [vmem:[#allocation3 + $0x18] sm:$0xff] %v262
          %328 = vst [vmem:[#allocation3 + $0x20] sm:$0xff] %v267
          %329 = vst [vmem:[#allocation3 + $0x28] sm:$0xff] %v272
          %330 = vst [vmem:[#allocation3 + $0x30] sm:$0xff] %v277
          %331 = vst [vmem:[#allocation3 + $0x38] sm:$0xff] %v282
          %332 = vst [vmem:[#allocation3 + $0x40] sm:$0xff] %v287
          %333 = vst [vmem:[#allocation3 + $0x48] sm:$0xff] %v292
          %334 = vst [vmem:[#allocation3 + $0x50] sm:$0xff] %v297
          %335 = vst [vmem:[#allocation3 + $0x58] sm:$0xff] %v302
          %336 = vst [vmem:[#allocation3 + $0x60] sm:$0xff] %v307
          %337 = vst [vmem:[#allocation3 + $0x68] sm:$0xff] %v312
          %338 = vst [vmem:[#allocation3 + $0x70] sm:$0xff] %v317
          %339 = vst [vmem:[#allocation3 + $0x78] sm:$0xff] %v322
        $region40: #{tpu_custom_call.1} parent=27 // pred_fallthru
          _
        %v340 = vld [vmem:[#allocation3] sm:$0xff]
        %v341 = vld [vmem:[#allocation3 + $0x8] sm:$0xff]
        %v342 = vld [vmem:[#allocation3 + $0x10] sm:$0xff]
        %v343 = vld [vmem:[#allocation3 + $0x18] sm:$0xff]
        %v344 = vld [vmem:[#allocation3 + $0x20] sm:$0xff]
        %v345 = vld [vmem:[#allocation3 + $0x28] sm:$0xff]
        %v346 = vld [vmem:[#allocation3 + $0x30] sm:$0xff]
        %v347 = vld [vmem:[#allocation3 + $0x38] sm:$0xff]
        %v348 = vld [vmem:[#allocation3 + $0x40] sm:$0xff]
        %v349 = vld [vmem:[#allocation3 + $0x48] sm:$0xff]
        %v350 = vld [vmem:[#allocation3 + $0x50] sm:$0xff]
        %v351 = vld [vmem:[#allocation3 + $0x58] sm:$0xff]
        %v352 = vld [vmem:[#allocation3 + $0x60] sm:$0xff]
        %v353 = vld [vmem:[#allocation3 + $0x68] sm:$0xff]
        %v354 = vld [vmem:[#allocation3 + $0x70] sm:$0xff]
        %v355 = vld [vmem:[#allocation3 + $0x78] sm:$0xff]
        %v356 = vld [vmem:[#allocation4] sm:$0x1]
        %v358 = vperm.slane %v356, 0
        %v360 = vsub.f32 %v358, %v340
        %v361 = vsub.f32 %v358, %v341
        %v362 = vsub.f32 %v358, %v342
        %v363 = vsub.f32 %v358, %v343
        %v364 = vsub.f32 %v358, %v344
        %v365 = vsub.f32 %v358, %v345
        %v366 = vsub.f32 %v358, %v346
        %v367 = vsub.f32 %v358, %v347
        %v368 = vsub.f32 %v358, %v348
        %v369 = vsub.f32 %v358, %v349
        %v370 = vsub.f32 %v358, %v350
        %v371 = vsub.f32 %v358, %v351
        %v372 = vsub.f32 %v358, %v352
        %v373 = vsub.f32 %v358, %v353
        %v374 = vsub.f32 %v358, %v354
        %v375 = vsub.f32 %v358, %v355
        %v376 = vmin.f32 %v360, 0.0
        %v377 = vmin.f32 %v361, 0.0
        %v378 = vmin.f32 %v362, 0.0
        %v379 = vmin.f32 %v363, 0.0
        %v380 = vmin.f32 %v364, 0.0
        %v381 = vmin.f32 %v365, 0.0
        %v382 = vmin.f32 %v366, 0.0
        %v383 = vmin.f32 %v367, 0.0
        %v384 = vmin.f32 %v368, 0.0
        %v385 = vmin.f32 %v369, 0.0
        %v386 = vmin.f32 %v370, 0.0
        %v387 = vmin.f32 %v371, 0.0
        %v388 = vmin.f32 %v372, 0.0
        %v389 = vmin.f32 %v373, 0.0
        %v390 = vmin.f32 %v374, 0.0
        %v391 = vmin.f32 %v375, 0.0
        %v392 = vmul.f32 %v376, %v376
        %v393 = vmul.f32 %v377, %v377
        %v394 = vmul.f32 %v378, %v378
        %v395 = vmul.f32 %v379, %v379
        %v396 = vmul.f32 %v380, %v380
        %v397 = vmul.f32 %v381, %v381
        %v398 = vmul.f32 %v382, %v382
        %v399 = vmul.f32 %v383, %v383
        %v400 = vmul.f32 %v384, %v384
        %v401 = vmul.f32 %v385, %v385
        %v402 = vmul.f32 %v386, %v386
        %v403 = vmul.f32 %v387, %v387
        %v404 = vmul.f32 %v388, %v388
        %v405 = vmul.f32 %v389, %v389
        %v406 = vmul.f32 %v390, %v390
        %v407 = vmul.f32 %v391, %v391
        %v408 = vadd.f32 %v392, 0.0
        %v409 = vadd.f32 %v393, 0.0
        %v410 = vadd.f32 %v394, 0.0
        %v411 = vadd.f32 %v395, 0.0
        %v412 = vadd.f32 %v396, 0.0
        %v413 = vadd.f32 %v397, 0.0
        %v414 = vadd.f32 %v398, 0.0
        %v415 = vadd.f32 %v399, 0.0
        %v416 = vadd.f32 %v400, 0.0
        %v417 = vadd.f32 %v401, 0.0
        %v418 = vadd.f32 %v402, 0.0
        %v419 = vadd.f32 %v403, 0.0
        %v420 = vadd.f32 %v404, 0.0
        %v421 = vadd.f32 %v405, 0.0
        %v422 = vadd.f32 %v406, 0.0
        %v423 = vadd.f32 %v407, 0.0
        %s424 = scalar_lea.vmem [#allocation4], 1
        %v425 = vld [vmem:[%s424] sm:$0x1]
        %v427 = vperm.slane %v425, 0
        %v429 = vsub.f32 %v427, %v340
        %v430 = vsub.f32 %v427, %v341
        %v431 = vsub.f32 %v427, %v342
        %v432 = vsub.f32 %v427, %v343
        %v433 = vsub.f32 %v427, %v344
        %v434 = vsub.f32 %v427, %v345
        %v435 = vsub.f32 %v427, %v346
        %v436 = vsub.f32 %v427, %v347
        %v437 = vsub.f32 %v427, %v348
        %v438 = vsub.f32 %v427, %v349
        %v439 = vsub.f32 %v427, %v350
        %v440 = vsub.f32 %v427, %v351
        %v441 = vsub.f32 %v427, %v352
        %v442 = vsub.f32 %v427, %v353
        %v443 = vsub.f32 %v427, %v354
        %v444 = vsub.f32 %v427, %v355
        %v445 = vmin.f32 %v429, 0.0
        %v446 = vmin.f32 %v430, 0.0
        %v447 = vmin.f32 %v431, 0.0
        %v448 = vmin.f32 %v432, 0.0
        %v449 = vmin.f32 %v433, 0.0
        %v450 = vmin.f32 %v434, 0.0
        %v451 = vmin.f32 %v435, 0.0
        %v452 = vmin.f32 %v436, 0.0
        %v453 = vmin.f32 %v437, 0.0
        %v454 = vmin.f32 %v438, 0.0
        %v455 = vmin.f32 %v439, 0.0
        %v456 = vmin.f32 %v440, 0.0
        %v457 = vmin.f32 %v441, 0.0
        %v458 = vmin.f32 %v442, 0.0
        %v459 = vmin.f32 %v443, 0.0
        %v460 = vmin.f32 %v444, 0.0
        %v461 = vmul.f32 %v445, %v445
        %v462 = vmul.f32 %v446, %v446
        %v463 = vmul.f32 %v447, %v447
        %v464 = vmul.f32 %v448, %v448
        %v465 = vmul.f32 %v449, %v449
        %v466 = vmul.f32 %v450, %v450
        %v467 = vmul.f32 %v451, %v451
        %v468 = vmul.f32 %v452, %v452
        %v469 = vmul.f32 %v453, %v453
        %v470 = vmul.f32 %v454, %v454
        %v471 = vmul.f32 %v455, %v455
        %v472 = vmul.f32 %v456, %v456
        %v473 = vmul.f32 %v457, %v457
        %v474 = vmul.f32 %v458, %v458
        %v475 = vmul.f32 %v459, %v459
        %v476 = vmul.f32 %v460, %v460
        %v477 = vadd.f32 %v408, %v461
        %v478 = vadd.f32 %v409, %v462
        %v479 = vadd.f32 %v410, %v463
        %v480 = vadd.f32 %v411, %v464
        %v481 = vadd.f32 %v412, %v465
        %v482 = vadd.f32 %v413, %v466
        %v483 = vadd.f32 %v414, %v467
        %v484 = vadd.f32 %v415, %v468
        %v485 = vadd.f32 %v416, %v469
        %v486 = vadd.f32 %v417, %v470
        %v487 = vadd.f32 %v418, %v471
        %v488 = vadd.f32 %v419, %v472
        %v489 = vadd.f32 %v420, %v473
        %v490 = vadd.f32 %v421, %v474
        %v491 = vadd.f32 %v422, %v475
        %v492 = vadd.f32 %v423, %v476
        %v493 = vld [vmem:[#allocation2] sm:$0xff]
        %v494 = vld [vmem:[#allocation2 + $0x8] sm:$0xff]
        %v495 = vld [vmem:[#allocation2 + $0x10] sm:$0xff]
        %v496 = vld [vmem:[#allocation2 + $0x18] sm:$0xff]
        %v497 = vld [vmem:[#allocation2 + $0x20] sm:$0xff]
        %v498 = vld [vmem:[#allocation2 + $0x28] sm:$0xff]
        %v499 = vld [vmem:[#allocation2 + $0x30] sm:$0xff]
        %v500 = vld [vmem:[#allocation2 + $0x38] sm:$0xff]
        %v501 = vld [vmem:[#allocation2 + $0x40] sm:$0xff]
        %v502 = vld [vmem:[#allocation2 + $0x48] sm:$0xff]
        %v503 = vld [vmem:[#allocation2 + $0x50] sm:$0xff]
        %v504 = vld [vmem:[#allocation2 + $0x58] sm:$0xff]
        %v505 = vld [vmem:[#allocation2 + $0x60] sm:$0xff]
        %v506 = vld [vmem:[#allocation2 + $0x68] sm:$0xff]
        %v507 = vld [vmem:[#allocation2 + $0x70] sm:$0xff]
        %v508 = vld [vmem:[#allocation2 + $0x78] sm:$0xff]
        %v509 = vadd.f32 %v493, %v477
        %v510 = vadd.f32 %v494, %v478
        %v511 = vadd.f32 %v495, %v479
        %v512 = vadd.f32 %v496, %v480
        %v513 = vadd.f32 %v497, %v481
        %v514 = vadd.f32 %v498, %v482
        %v515 = vadd.f32 %v499, %v483
        %v516 = vadd.f32 %v500, %v484
        %v517 = vadd.f32 %v501, %v485
        %v518 = vadd.f32 %v502, %v486
        %v519 = vadd.f32 %v503, %v487
        %v520 = vadd.f32 %v504, %v488
        %v521 = vadd.f32 %v505, %v489
        %v522 = vadd.f32 %v506, %v490
        %v523 = vadd.f32 %v507, %v491
        %v524 = vadd.f32 %v508, %v492
        %525 = vst [vmem:[#allocation2] sm:$0xff] %v509
        %526 = vst [vmem:[#allocation2 + $0x8] sm:$0xff] %v510
        %527 = vst [vmem:[#allocation2 + $0x10] sm:$0xff] %v511
        %528 = vst [vmem:[#allocation2 + $0x18] sm:$0xff] %v512
        %529 = vst [vmem:[#allocation2 + $0x20] sm:$0xff] %v513
        %530 = vst [vmem:[#allocation2 + $0x28] sm:$0xff] %v514
        %531 = vst [vmem:[#allocation2 + $0x30] sm:$0xff] %v515
        %532 = vst [vmem:[#allocation2 + $0x38] sm:$0xff] %v516
        %533 = vst [vmem:[#allocation2 + $0x40] sm:$0xff] %v517
        %534 = vst [vmem:[#allocation2 + $0x48] sm:$0xff] %v518
        %535 = vst [vmem:[#allocation2 + $0x50] sm:$0xff] %v519
        %536 = vst [vmem:[#allocation2 + $0x58] sm:$0xff] %v520
        %537 = vst [vmem:[#allocation2 + $0x60] sm:$0xff] %v521
        %538 = vst [vmem:[#allocation2 + $0x68] sm:$0xff] %v522
        %539 = vst [vmem:[#allocation2 + $0x70] sm:$0xff] %v523
        %540 = vst [vmem:[#allocation2 + $0x78] sm:$0xff] %v524
        // Predicated region
        $region41: #{tpu_custom_call.1} parent=27 // pred_check
          %p541 = pneg %p191
        $region42: #{tpu_custom_call.1} parent=27 // pred_check_branch
          %543 = sbr.rel (%p541) target = $region44
        $region43: #{tpu_custom_call.1} parent=27 // pred_region
          %v544 = vld [vmem:[#allocation2] sm:$0xff]
          %v545 = vld [vmem:[#allocation2 + $0x8] sm:$0xff]
          %v546 = vld [vmem:[#allocation2 + $0x10] sm:$0xff]
          %v547 = vld [vmem:[#allocation2 + $0x18] sm:$0xff]
          %v548 = vld [vmem:[#allocation2 + $0x20] sm:$0xff]
          %v549 = vld [vmem:[#allocation2 + $0x28] sm:$0xff]
          %v550 = vld [vmem:[#allocation2 + $0x30] sm:$0xff]
          %v551 = vld [vmem:[#allocation2 + $0x38] sm:$0xff]
          %v552 = vld [vmem:[#allocation2 + $0x40] sm:$0xff]
          %v553 = vld [vmem:[#allocation2 + $0x48] sm:$0xff]
          %v554 = vld [vmem:[#allocation2 + $0x50] sm:$0xff]
          %v555 = vld [vmem:[#allocation2 + $0x58] sm:$0xff]
          %v556 = vld [vmem:[#allocation2 + $0x60] sm:$0xff]
          %v557 = vld [vmem:[#allocation2 + $0x68] sm:$0xff]
          %v558 = vld [vmem:[#allocation2 + $0x70] sm:$0xff]
          %v559 = vld [vmem:[#allocation2 + $0x78] sm:$0xff]
          %v560 = vadd.f32 %v544, %v545
          %v561 = vadd.f32 %v560, %v546
          %v562 = vadd.f32 %v561, %v547
          %v563 = vadd.f32 %v562, %v548
          %v564 = vadd.f32 %v563, %v549
          %v565 = vadd.f32 %v564, %v550
          %v566 = vadd.f32 %v565, %v551
          %v567 = vadd.f32 %v566, %v552
          %v568 = vadd.f32 %v567, %v553
          %v569 = vadd.f32 %v568, %v554
          %v570 = vadd.f32 %v569, %v555
          %v571 = vadd.f32 %v570, %v556
          %v572 = vadd.f32 %v571, %v557
          %v573 = vadd.f32 %v572, %v558
          %v574 = vadd.f32 %v573, %v559
          %v575 = vrot.slane %v574, 4
          %v576 = vadd.f32 %v574, %v575
          %v577 = vrot.slane %v576, 2
          %v578 = vadd.f32 %v576, %v577
          %v579 = vrot.slane %v578, 1
          %v580 = vadd.f32 %v578, %v579
          %581 = vst [vmem:[%s189] sm:$0x1] %v580
        $region44: #{tpu_custom_call.1} parent=27 // pred_fallthru
          _
        %s582 = sand.u32 %s92, 1
        %s583 = scalar_lea.sflag [#allocation6], %s582
        %s584 = sand.u32 %s92, 1
        %s585 = scalar_lea.vmem [#allocation9], %s584
        // Predicated region
        $region45: #{tpu_custom_call.1} parent=27 // pred_check
          %p586 = pneg %p102
        $region46: #{tpu_custom_call.1} parent=27 // pred_check_branch
          %588 = sbr.rel (%p586) target = $region48
        $region47: #{tpu_custom_call.1} parent=27 // pred_region
          %590 = vsyncadd %s583, 0
          %s591 = scalar_lea.hbm %s2, %s24
          %s593 = sshll.u32 %s585, 4
          %s594 = int_to_ptr.vmem [resolvable:$true] %s593
          %s595 = sshll.u32 %s591, 4
          %s596 = int_to_ptr.hbm [resolvable:$true] %s595
          %598 = dma.vmem_to_hbm [thread:$0]  %s594, 16, %s596, %s583
        $region48: #{tpu_custom_call.1} parent=27 // pred_fallthru
          _
      $region28: #{tpu_custom_call.1} parent=5 // pred_fallthru
        _
      %p599 = scmp.le.s32.totalorder 2, %s15
      // Predicated region
      $region49: #{tpu_custom_call.1} parent=5 // pred_check
        %p600 = pneg %p599
      $region50: #{tpu_custom_call.1} parent=5 // pred_check_branch
        %602 = sbr.rel (%p600) target = $region52
      $region51: #{tpu_custom_call.1} parent=5 // pred_region
        %s603 = ssub.s32 %s15, 2
        // Predicated region
        $region53: #{tpu_custom_call.1} parent=51 // pred_check
          %p604 = pneg %p108
        $region54: #{tpu_custom_call.1} parent=51 // pred_check_branch
          %606 = sbr.rel (%p604) target = $region56
        $region55: #{tpu_custom_call.1} parent=51 // pred_region
          %s607 = sand.u32 %s93, 1
          %s608 = scalar_lea.sflag [#allocation6], %s607
          %s609 = sand.u32 %s93, 1
          %s610 = scalar_lea.vmem [#allocation9], %s609
          %612 = dma.done %s608, 16
        $region56: #{tpu_custom_call.1} parent=51 // pred_fallthru
          _
      $region52: #{tpu_custom_call.1} parent=5 // pred_fallthru
        _
    $region6: #{tpu_custom_call.1} parent=1 // loop_footer
      %s19 = sadd.s32 1, %s15
    $region7: #{tpu_custom_call.1} parent=1 // loop_footer_branch
      %14 = sbr.rel target = $region3
    $region8: #{tpu_custom_call.1} parent=1 // loop_exit
      _
    %613 = vsyncpa [#allocation5], 1
    %s614 = scalar_lea.sflag [#allocation5], 1
    %615 = vsyncpa %s614, 1
    %616 = vsyncpa [#allocation8], 1
    %s617 = scalar_lea.sflag [#allocation8], 1
    %618 = vsyncpa %s617, 1
    %619 = vsyncpa [#allocation6], 1
    %s620 = scalar_lea.sflag [#allocation6], 1
    %621 = vsyncpa %s620, 1

</llo_original>
